<compile_context>
chip_gen: v7x
topology: tpu7x:2x2x1
jax: 0.10.0
libtpu: 0.0.40
codegen_flags: <defaults>
</compile_context>

<pallas_src>
import functools

import jax
import jax.numpy as jnp
from jax.experimental import pallas as pl
from jax.experimental.pallas import tpu as pltpu


# ----------------------------------------------------------------------------
# Pallas kernel: one SIGN-hop tile step.
#   o[i] <- diag(dis[i]) @ sum_k A^T[i, k] @ (diag(dis[k]) @ X[k])
# A^T tile is streamed as int8 and cast to bf16 in-kernel (VPU work hidden
# under the A DMA); X is a bf16, pre-scaled, VMEM-resident copy; accumulation
# is f32 directly in o_ref.  Do NOT change the output dtype to bf16 -- the
# per-step += would then truncate partial sums.
# ----------------------------------------------------------------------------
def _sign_hop_kernel(a_ref, di_ref, x_ref, o_ref, *, tk):
    k = pl.program_id(1)

    # Slice the resident pre-scaled X (bf16, (tk, F)).
    start = pl.multiple_of(k * tk, tk)
    x_blk = x_ref[pl.ds(start, tk), :]

    contrib = jnp.dot(
        a_ref[...].astype(jnp.bfloat16),   # int8 -> bf16, exact for 0/1 adjacency
        x_blk,
        preferred_element_type=jnp.float32,
    )                                      # f32 (tm, F)

    @pl.when(k == 0)
    def _init():
        o_ref[...] = contrib

    @pl.when(k > 0)
    def _accumulate():
        o_ref[...] += contrib

    @pl.when(k == pl.num_programs(1) - 1)
    def _finalize():
        # Destination-side deg^-1/2 scaling (tm x F, cheap).
        o_ref[...] *= di_ref[...]


# ----------------------------------------------------------------------------
# Per-generation tile / VMEM-budget selection.
# ----------------------------------------------------------------------------
def _round_up(v, m):
    return ((v + m - 1) // m) * m


def _vmem_budget_bytes():
    """~75% of this chip's physical VMEM (96 MiB v5e/v6e, 48 MiB v7x)."""
    cap = None
    try:
        info = pltpu.get_tpu_info()
        cap = getattr(info, "vmem_capacity_bytes", None)
    except Exception:
        cap = None
    if not cap:
        cap = 64 * 1024 * 1024  # conservative fallback: v7x per-TensorCore VMEM
    return int(cap) * 3 // 4


def _pick_tiles(n_pad, f, vmem_budget_bytes):
    """Pick (tm, tk): large tiles to amortize the ~0.35 us per-grid-step
    overhead, fit the VMEM budget, and keep >= 2 row blocks for megacore when
    possible.  tk (contraction axis) is capped at 1024, tm at 2048."""
    cands = [c for c in (2048, 1024, 512, 256) if n_pad % c == 0]
    if not cands:                       # n_pad is always a multiple of 256
        cands = [n_pad]
    x_bytes = 2 * n_pad * f * 2         # resident bf16 X, double-buffered

    def fits(tm, tk):
        a_bytes = 2 * tm * tk           # int8 A tiles, double-buffered
        o_bytes = 2 * tm * f * 4        # f32 output blocks
        d_bytes = 2 * tm * 4            # deg^-1/2 blocks
        return x_bytes + a_bytes + o_bytes + d_bytes <= vmem_budget_bytes

    for prefer_megacore in (True, False):
        for tk in [c for c in cands if c <= 1024]:
            for tm in cands:
                if prefer_megacore and tm * 2 > n_pad:
                    continue
                if fits(tm, tk):
                    return tm, tk
    # TODO(synk): if even the smallest tiles do not fit (huge N*F resident X),
    # X itself would need to be streamed/tiled; not needed at these scales.
    return min(cands), min(min(cands), 1024)


# ----------------------------------------------------------------------------
# One SIGN hop via pallas_call.
# ----------------------------------------------------------------------------
def _propagate(adj_t_i8, dis, x_scaled_bf16, *, tm, tk, vmem_limit):
    """out = diag(dis) @ (A^T @ x_scaled), with x_scaled = diag(dis) @ x in bf16."""
    n_pad = adj_t_i8.shape[0]
    f = x_scaled_bf16.shape[1]

    kernel = functools.partial(_sign_hop_kernel, tk=tk)

    # TODO(synk): sweep pipeline_mode=pl.Buffered(3) on the A^T spec and
    # pl.Buffered(1) on the resident-X spec; omitted to keep lowering portable.
    return pl.pallas_call(
        kernel,
        out_shape=jax.ShapeDtypeStruct((n_pad, f), jnp.float32),
        grid_spec=pltpu.PrefetchScalarGridSpec(
            num_scalar_prefetch=0,
            grid=(n_pad // tm, n_pad // tk),
            in_specs=[
                # A^T tile, int8 -- the only operand streamed per step.
                pl.BlockSpec((tm, tk), lambda i, k: (i, k)),
                # deg^-1/2 for destination nodes of this i block.
                pl.BlockSpec((tm, 1), lambda i, k: (i, 0)),
                # Pre-scaled bf16 X, fully VMEM-resident (constant block index).
                pl.BlockSpec((n_pad, f), lambda i, k: (0, 0)),
            ],
            out_specs=pl.BlockSpec((tm, f), lambda i, k: (i, 0)),
        ),
        compiler_params=pltpu.CompilerParams(
            dimension_semantics=("parallel", "arbitrary"),
            vmem_limit_bytes=vmem_limit,
        ),
    )(adj_t_i8, dis, x_scaled_bf16)


def _sign_precompute_core(adj, x, *, num_layers, n_pad, tm, tk, vmem_limit):
    """Jitted core: padding, normalization prep, and num_layers hop calls."""
    n = adj.shape[0]
    pad = n_pad - n

    # deg = rowsum(A^T) = colsum(A); 1/sqrt(0) -> 0 (matches SIGN / gcn_norm).
    deg = jnp.sum(adj, axis=0, dtype=jnp.float32)
    dis = jnp.where(deg > 0, jax.lax.rsqrt(deg), 0.0)
    dis = jnp.pad(dis, (0, pad)).reshape(n_pad, 1)

    # Cast to the narrow storage dtype BEFORE the transpose (no f32 N^2 copy),
    # then zero-pad.  int8 is exact for a 0/1 adjacency.
    adj_t_i8 = jnp.swapaxes(adj.astype(jnp.int8), 0, 1)
    adj_t_i8 = jnp.pad(adj_t_i8, ((0, pad), (0, pad)))

    x0 = x.astype(jnp.float32)
    cur = jnp.pad(x0, ((0, pad), (0, 0)))

    xs = [x0]
    for _ in range(num_layers):
        # Pre-scale by source-side deg^-1/2 and pre-cast to bf16 once per hop.
        x_scaled = (cur * dis).astype(jnp.bfloat16)
        cur = _propagate(adj_t_i8, dis, x_scaled, tm=tm, tk=tk,
                         vmem_limit=vmem_limit)
        xs.append(cur[:n])
    return xs


def sign_precompute(adj, x, num_layers):
    """SIGN(num_layers): xs = [x, A_hat x, A_hat^2 x, ...] with
    A_hat = D^-1/2 A^T D^-1/2 and deg = rowsum(A^T).  adj must be a dense
    binary [N, N] adjacency; x is [N, F]."""
    n = adj.shape[0]
    f = x.shape[1]
    n_pad = _round_up(n, 256)
    budget = _vmem_budget_bytes()
    tm, tk = _pick_tiles(n_pad, f, budget)

    core = jax.jit(functools.partial(
        _sign_precompute_core,
        num_layers=num_layers, n_pad=n_pad, tm=tm, tk=tk, vmem_limit=budget))
    return core(adj, x)


class PrecomputingBase:
    """JAX analogue of the PyTorch PrecomputingBase (precompute only)."""

    def __init__(self, num_layers, adj, x):
        self.num_layers = num_layers
        self.xs = sign_precompute(adj, x, num_layers)

    def forward(self, xs):
        # TODO(synk): forward() is abstract in the reference base class
        # (subclasses define it); nothing to translate here.
        raise NotImplementedError


if __name__ == "__main__":
    NUM_LAYERS = 3
    F = 128  # multiple of 128 -> lane-dense output stores

    def run_case(n):
        key = jax.random.fold_in(jax.random.PRNGKey(0), n)
        k_adj, k_x = jax.random.split(key)

        # Deterministic random symmetric binary adjacency, no self loops.
        a_rand = jax.random.bernoulli(k_adj, p=0.05, shape=(n, n))
        adj = jnp.logical_or(a_rand, a_rand.T).astype(jnp.float32)
        adj = adj * (1.0 - jnp.eye(n, dtype=jnp.float32))
        x = jax.random.normal(k_x, (n, F), dtype=jnp.float32)

        model = PrecomputingBase(NUM_LAYERS, adj, x)
        xs = [jax.block_until_ready(t) for t in model.xs]
        assert len(xs) == NUM_LAYERS + 1
        assert all(t.shape == (n, F) for t in xs)

        # References:
        #  * "mimic": the kernel's math (bf16 A^T, bf16 pre-scaled X, f32 acc)
        #  * "f32":   pure f32 SIGN, loose tolerance (bf16 streaming changes numerics)
        adj_t = adj.T
        deg = jnp.sum(adj_t, axis=1)
        dis = jnp.where(deg > 0, 1.0 / jnp.sqrt(deg), 0.0)
        a_hat_f32 = dis[:, None] * adj_t * dis[None, :]

        ref_mimic = x
        ref_f32 = x
        for i in range(1, NUM_LAYERS + 1):
            scaled = (ref_mimic * dis[:, None]).astype(jnp.bfloat16)
            ref_mimic = dis[:, None] * jnp.dot(
                adj_t.astype(jnp.bfloat16), scaled,
                preferred_element_type=jnp.float32)
            ref_f32 = a_hat_f32 @ ref_f32
            assert jnp.allclose(xs[i], ref_mimic, atol=5e-3, rtol=5e-3), \
                f"N={n} hop {i} (mimic)"
            assert jnp.allclose(xs[i], ref_f32, atol=5e-2, rtol=5e-2), \
                f"N={n} hop {i} (f32)"

    # Exercises padding (600 -> 768) and a multi-block contraction axis
    # (init / accumulate / finalize each on separate grid steps).
    run_case(600)
    # Exercises padding (300 -> 512) and the degenerate k-grid of size 1
    # (init and finalize fire on the same step).
    run_case(300)

    print("KERNEL_OK")
</pallas_src>

<mosaic_0001>
module attributes {stable_mosaic.version = 11 : i64} {
  func.func @_sign_hop_kernel(%arg0: i32, %arg1: i32, %arg2: memref<256x256xi8, #tpu.memory_space<vmem>>, %arg3: memref<256x1xf32, #tpu.memory_space<vmem>>, %arg4: memref<768x128xbf16, #tpu.memory_space<vmem>>, %arg5: memref<256x128xf32, #tpu.memory_space<vmem>>) attributes {dimension_semantics = [#tpu.dimension_semantics<parallel>, #tpu.dimension_semantics<arbitrary>], iteration_bounds = array<i64: 3, 3>, scalar_prefetch = 0 : i64, scratch_operands = 0 : i64, tpu.core_type = #tpu.core_type<tc>, window_params = [{transform_indices = @transform_0, window_bounds = array<i64: 256, 256>}, {transform_indices = @transform_1, window_bounds = array<i64: 256, 1>}, {pipeline_mode = #tpu.pipeline_mode<synchronous>, transform_indices = @transform_2, window_bounds = array<i64: 768, 128>}, {transform_indices = @transform_3, window_bounds = array<i64: 256, 128>}]} {
    %c256_i32 = arith.constant 256 : i32
    %0 = arith.muli %arg1, %c256_i32 : i32
    %1 = tpu.assume_multiple %0, 256 : i32
    %2 = arith.index_cast %1 : i32 to index
    %c0 = arith.constant 0 : index
    %3 = vector.load %arg4[%2, %c0] : memref<768x128xbf16, #tpu.memory_space<vmem>>, vector<256x128xbf16>
    %c0_0 = arith.constant 0 : index
    %c0_1 = arith.constant 0 : index
    %4 = vector.load %arg2[%c0_0, %c0_1] : memref<256x256xi8, #tpu.memory_space<vmem>>, vector<256x256xi8>
    %5 = arith.sitofp %4 : vector<256x256xi8> to vector<256x256xbf16>
    %cst = arith.constant dense<0.000000e+00> : vector<256x128xf32>
    %6 = tpu.matmul %5, %3, %cst {dimension_numbers = #tpu.dot_dimension_numbers<[1], [0], [0], [1], [0, 0, 1, 1], [], []>} : vector<256x256xbf16>, vector<256x128xbf16>, vector<256x128xf32> -> vector<256x128xf32>
    %c0_i32 = arith.constant 0 : i32
    %7 = arith.cmpi eq, %arg1, %c0_i32 : i32
    %8 = arith.extui %7 : i1 to i32
    %c0_i32_2 = arith.constant 0 : i32
    %9 = arith.cmpi ne, %8, %c0_i32_2 : i32
    scf.if %9 {
      %c0_6 = arith.constant 0 : index
      %c0_7 = arith.constant 0 : index
      %16 = vector.load %arg5[%c0_6, %c0_7] : memref<256x128xf32, #tpu.memory_space<vmem>>, vector<256x128xf32>
      tpu.vector_store %arg5[%c0_6, %c0_7], %6 {strides = array<i32>} : memref<256x128xf32, #tpu.memory_space<vmem>>, vector<256x128xf32>,
    } else {
    }
    %c0_i32_3 = arith.constant 0 : i32
    %10 = arith.cmpi sgt, %arg1, %c0_i32_3 : i32
    %11 = arith.extui %10 : i1 to i32
    %c0_i32_4 = arith.constant 0 : i32
    %12 = arith.cmpi ne, %11, %c0_i32_4 : i32
    scf.if %12 {
      %c0_6 = arith.constant 0 : index
      %c0_7 = arith.constant 0 : index
      %16 = vector.load %arg5[%c0_6, %c0_7] : memref<256x128xf32, #tpu.memory_space<vmem>>, vector<256x128xf32>
      %17 = arith.addf %16, %6 : vector<256x128xf32>
      %c0_8 = arith.constant 0 : index
      %c0_9 = arith.constant 0 : index
      %18 = vector.load %arg5[%c0_8, %c0_9] : memref<256x128xf32, #tpu.memory_space<vmem>>, vector<256x128xf32>
      tpu.vector_store %arg5[%c0_8, %c0_9], %17 {strides = array<i32>} : memref<256x128xf32, #tpu.memory_space<vmem>>, vector<256x128xf32>,
    } else {
    }
    %c2_i32 = arith.constant 2 : i32
    %13 = arith.cmpi eq, %arg1, %c2_i32 : i32
    %14 = arith.extui %13 : i1 to i32
    %c0_i32_5 = arith.constant 0 : i32
    %15 = arith.cmpi ne, %14, %c0_i32_5 : i32
    scf.if %15 {
      %c0_6 = arith.constant 0 : index
      %c0_7 = arith.constant 0 : index
      %16 = vector.load %arg5[%c0_6, %c0_7] : memref<256x128xf32, #tpu.memory_space<vmem>>, vector<256x128xf32>
      %c0_8 = arith.constant 0 : index
      %c0_9 = arith.constant 0 : index
      %17 = vector.load %arg3[%c0_8, %c0_9] : memref<256x1xf32, #tpu.memory_space<vmem>>, vector<256x1xf32>
      %18 = vector.broadcast %17 : vector<256x1xf32> to vector<256x128xf32>
      %19 = arith.mulf %16, %18 : vector<256x128xf32>
      %c0_10 = arith.constant 0 : index
      %c0_11 = arith.constant 0 : index
      %20 = vector.load %arg5[%c0_10, %c0_11] : memref<256x128xf32, #tpu.memory_space<vmem>>, vector<256x128xf32>
      tpu.vector_store %arg5[%c0_10, %c0_11], %19 {strides = array<i32>} : memref<256x128xf32, #tpu.memory_space<vmem>>, vector<256x128xf32>,
    } else {
    }
    return
  }
  func.func @transform_0(%arg0: i32, %arg1: i32) -> (i32, i32) {
    %c0_i32 = arith.constant 0 : i32
    return %arg0, %arg1 : i32, i32
  }
  func.func @transform_1(%arg0: i32, %arg1: i32) -> (i32, i32) {
    %c0_i32 = arith.constant 0 : i32
    %c0_i32_0 = arith.constant 0 : i32
    return %arg0, %c0_i32 : i32, i32
  }
  func.func @transform_2(%arg0: i32, %arg1: i32) -> (i32, i32) {
    %c0_i32 = arith.constant 0 : i32
    %c0_i32_0 = arith.constant 0 : i32
    %c0_i32_1 = arith.constant 0 : i32
    return %c0_i32, %c0_i32_0 : i32, i32
  }
  func.func @transform_3(%arg0: i32, %arg1: i32) -> (i32, i32) {
    %c0_i32 = arith.constant 0 : i32
    %c0_i32_0 = arith.constant 0 : i32
    return %arg0, %c0_i32 : i32, i32
  }
}

</mosaic_0001>

<llo_original>
// kernel: _sign_precompute_core.3
$region0: #{_sign_precompute_core.3}
  #allocation0 [shape = 'u32[]', space=smem, size = 0x4, offset = 0x4, fixed_abs, tag = 'smem constant byte address 0x4 - core index']
  #allocation1 [shape = 'u32[144,128]{1,0:T(1,128)}', space=vmem, size = 0x12000, scoped, tag = 'internal scratch']
  %s0 = inlined_call_operand.vmem [shape: s8[768,768], index: 0, kind: input, shape index: {}]
  %s1 = inlined_call_operand.vmem [shape: f32[768,1], index: 1, kind: input, shape index: {}]
  %s2 = inlined_call_operand.vmem [shape: bf16[768,128], index: 2, kind: input, shape index: {}]
  %s3 = inlined_call_operand.vmem [shape: f32[768,128], index: 3, kind: output, shape index: {}]
  %s4 = sld [smem:[#allocation0]]
  $region80: #{_sign_precompute_core.3} parent=0
    _
  %s6 = ssub.s32 1, %s4
  %s7 = scalar_select 0, %s6, %s4
  $region1: #{_sign_precompute_core.3} parent=0
    #allocation2 [shape = 'u8[131072]{0}', space=vmem, size = 0x20000, scoped, tag = 'input window, operand 0']
    loop: start=0, step=1, limit=11
    $region2: #{_sign_precompute_core.3} parent=1 // loop_pre_header
      _
    $region3: #{_sign_precompute_core.3} parent=1 // loop_header
      %s9 = sphi 0, %s13
      %p10 = scmp.ge.s32.totalorder %s9, 11
      %s16 = sphi 0, %s28
      %s17 = sphi 0, %s24
      %s18 = sphi 0, %s16
      %s19 = sphi 0, %s17
      %s20 = sphi 0, %s18
      %s21 = sphi 0, %s19
      %s33 = sphi 0, %s35
      %s36 = sphi 0, %s33
      %s37 = sphi 0, %s36
      %s53 = sphi 0, %s37
      %s59 = sphi 0, %s61
      %s62 = sphi 0, %s59
      %s63 = sphi 0, %s62
      %s79 = sphi 0, %s63
      %s83 = sphi 0, %s83
      %s85 = sphi 0, %s83
      %s86 = sphi 0, %s85
      %s100 = sphi 0, %s86
      %s106 = sphi 0, %s108
      %s109 = sphi 0, %s106
      %s110 = sphi 0, %s109
      %s126 = sphi 0, %s110
    $region4: #{_sign_precompute_core.3} parent=1 // loop_header_branch
      %12 = sbr.rel (%p10) target = $region8
    $region5: #{_sign_precompute_core.3} parent=1 // loop_body
      %s14 = ssub.s32 %s9, 1
      %s15 = ssub.s32 %s9, 2
      %s22 = sadd.s32 1, %s17
      %p23 = scmp.ge.s32.totalorder %s22, 3
      %s24 = scalar_select %p23, 0, %s22
      %s25 = sadd.s32 1, %s16
      %s26 = scalar_select %p23, %s25, %s16
      %p27 = scmp.ge.s32.totalorder %s26, 3
      %s28 = scalar_select %p27, 0, %s26
      %s29 = ssub.s32 %s16, %s28
      %s30 = ssub.s32 %s17, %s24
      %s31 = sor.u32 %s29, %s30
      %p32 = scmp.eq.s32.totalorder %s31, 0
      %s34 = sadd.s32 %s33, 1
      %s35 = scalar_select %p32, %s33, %s34
      %p38 = pneg %p32
      %p39 = scmp.eq.s32.totalorder %s9, 8
      %p40 = por %p38, %p39
      %p41 = scmp.ne.s32.totalorder %s33, %s36
      %p42 = scmp.eq.s32.totalorder %s9, 0
      %p43 = por %p41, %p42
      %p44 = scmp.ne.s32.totalorder %s33, %s36
      %p45 = scmp.eq.s32.totalorder %s14, 8
      %p46 = por %p44, %p45
      %p47 = scmp.ne.s32.totalorder %s36, %s37
      %p48 = scmp.eq.s32.totalorder %s14, 0
      %p49 = por %p47, %p48
      %p50 = scmp.ne.s32.totalorder %s36, %s37
      %p51 = scmp.eq.s32.totalorder %s15, 8
      %p52 = por %p50, %p51
      %p54 = scmp.ne.s32.totalorder %s37, %s53
      %p55 = scmp.eq.s32.totalorder %s15, 0
      %p56 = por %p54, %p55
      %s57 = ssub.s32 %s16, %s28
      %p58 = scmp.eq.s32.totalorder %s57, 0
      %s60 = sadd.s32 %s59, 1
      %s61 = scalar_select %p58, %s59, %s60
      %p64 = pneg %p58
      %p65 = scmp.eq.s32.totalorder %s9, 8
      %p66 = por %p64, %p65
      %p67 = scmp.ne.s32.totalorder %s59, %s62
      %p68 = scmp.eq.s32.totalorder %s9, 0
      %p69 = por %p67, %p68
      %p70 = scmp.ne.s32.totalorder %s59, %s62
      %p71 = scmp.eq.s32.totalorder %s14, 8
      %p72 = por %p70, %p71
      %p73 = scmp.ne.s32.totalorder %s62, %s63
      %p74 = scmp.eq.s32.totalorder %s14, 0
      %p75 = por %p73, %p74
      %p76 = scmp.ne.s32.totalorder %s62, %s63
      %p77 = scmp.eq.s32.totalorder %s15, 8
      %p78 = por %p76, %p77
      %p80 = scmp.ne.s32.totalorder %s63, %s79
      %p81 = scmp.eq.s32.totalorder %s15, 0
      %p82 = por %p80, %p81
      %s84 = sadd.s32 %s83, 1
      %p87 = scmp.eq.s32.totalorder %s9, 8
      %p88 = scmp.ne.s32.totalorder %s83, %s85
      %p89 = scmp.eq.s32.totalorder %s9, 0
      %p90 = por %p88, %p89
      %p91 = scmp.ne.s32.totalorder %s83, %s85
      %p92 = scmp.eq.s32.totalorder %s14, 8
      %p93 = por %p91, %p92
      %p94 = scmp.ne.s32.totalorder %s85, %s86
      %p95 = scmp.eq.s32.totalorder %s14, 0
      %p96 = por %p94, %p95
      %p97 = scmp.ne.s32.totalorder %s85, %s86
      %p98 = scmp.eq.s32.totalorder %s15, 8
      %p99 = por %p97, %p98
      %p101 = scmp.ne.s32.totalorder %s86, %s100
      %p102 = scmp.eq.s32.totalorder %s15, 0
      %p103 = por %p101, %p102
      %s104 = ssub.s32 %s16, %s28
      %p105 = scmp.eq.s32.totalorder %s104, 0
      %s107 = sadd.s32 %s106, 1
      %s108 = scalar_select %p105, %s106, %s107
      %p111 = pneg %p105
      %p112 = scmp.eq.s32.totalorder %s9, 8
      %p113 = por %p111, %p112
      %p114 = scmp.ne.s32.totalorder %s106, %s109
      %p115 = scmp.eq.s32.totalorder %s9, 0
      %p116 = por %p114, %p115
      %p117 = scmp.ne.s32.totalorder %s106, %s109
      %p118 = scmp.eq.s32.totalorder %s14, 8
      %p119 = por %p117, %p118
      %p120 = scmp.ne.s32.totalorder %s109, %s110
      %p121 = scmp.eq.s32.totalorder %s14, 0
      %p122 = por %p120, %p121
      %p123 = scmp.ne.s32.totalorder %s109, %s110
      %p124 = scmp.eq.s32.totalorder %s15, 8
      %p125 = por %p123, %p124
      %p127 = scmp.ne.s32.totalorder %s110, %s126
      %p128 = scmp.eq.s32.totalorder %s15, 0
      %p129 = por %p127, %p128
      %p130 = scmp.le.s32.totalorder 1, %s9
      %p131 = scmp.lt.s32.totalorder %s9, 10
      %p132 = pnand %p130, %p131
      %p133 = pneg %p132
      // Predicated region
      $region9: #{_sign_precompute_core.3} parent=5 // pred_check
        _
      $region10: #{_sign_precompute_core.3} parent=5 // pred_check_branch
        %135 = sbr.rel (%p132) target = $region12
      $region11: #{_sign_precompute_core.3} parent=5 // pred_region
        %s136 = ssub.s32 %s9, 1
        // Predicated region
        $region13: #{_sign_precompute_core.3} parent=11 // pred_check
          %p137 = pneg %p96
        $region14: #{_sign_precompute_core.3} parent=11 // pred_check_branch
          %139 = sbr.rel (%p137) target = $region16
        $region15: #{_sign_precompute_core.3} parent=11 // pred_region
          _
        $region16: #{_sign_precompute_core.3} parent=11 // pred_fallthru
          _
      $region12: #{_sign_precompute_core.3} parent=5 // pred_fallthru
        _
      %p140 = scmp.lt.s32.totalorder %s9, 9
      // Predicated region
      $region17: #{_sign_precompute_core.3} parent=5 // pred_check
        %p141 = pneg %p140
      $region18: #{_sign_precompute_core.3} parent=5 // pred_check_branch
        %143 = sbr.rel (%p141) target = $region20
      $region19: #{_sign_precompute_core.3} parent=5 // pred_region
        // Predicated region
        $region21: #{_sign_precompute_core.3} parent=19 // pred_check
          %p144 = pneg %p43
        $region22: #{_sign_precompute_core.3} parent=19 // pred_check_branch
          %146 = sbr.rel (%p144) target = $region24
        $region23: #{_sign_precompute_core.3} parent=19 // pred_region
          %s147 = sand.u32 %s33, 1
          %s148 = sand.u32 %s33, 1
          %s149 = smul.addr %s148, 128
          %s150 = scalar_lea.vmem [#allocation2], %s149
          %s151 = smul.u32 8, %s16
          %s152 = smul.u32 2, %s17
          %s153 = smul.addr %s151, 6
          %s154 = sadd.s32 %s152, %s153
          %s155 = smul.addr %s154, 8
          %s156 = scalar_lea.vmem %s0, %s155
          // Predicated region
          $region25: #{_sign_precompute_core.3} parent=23 // pred_check
            _
          $region26: #{_sign_precompute_core.3} parent=23 // pred_check_branch
            %158 = sbr.rel (0) target = $region28
          $region27: #{_sign_precompute_core.3} parent=23 // pred_region
            // Predicated region
            $region29: #{_sign_precompute_core.3} parent=27 // pred_check
              _
            $region30: #{_sign_precompute_core.3} parent=27 // pred_check_branch
              %160 = sbr.rel (0) target = $region32
            $region31: #{_sign_precompute_core.3} parent=27 // pred_region
              loop: start=0, step=1, limit=1
              $region33: #{_sign_precompute_core.3} parent=31 // loop_pre_header
                _
              $region34: #{_sign_precompute_core.3} parent=31 // loop_header
                %s162 = sphi 0, %s166
                %p163 = scmp.ge.s32.totalorder %s162, 1
                %s167 = sphi %s156, %s156
                %s168 = sphi %s150, %s150
              $region35: #{_sign_precompute_core.3} parent=31 // loop_header_branch
                %165 = sbr.rel (%p163) target = $region39
              $region36: #{_sign_precompute_core.3} parent=31 // loop_body
                %v169 = vld [vmem:[%s167] sm:$0xff]
                %170 = vst [vmem:[%s168] sm:$0xff] %v169
                %v171 = vld [vmem:[%s167 + $0x8] sm:$0xff]
                %172 = vst [vmem:[%s168 + $0x8] sm:$0xff] %v171
                %v173 = vld [vmem:[%s167 + $0x30] sm:$0xff]
                %174 = vst [vmem:[%s168 + $0x10] sm:$0xff] %v173
                %v175 = vld [vmem:[%s167 + $0x38] sm:$0xff]
                %176 = vst [vmem:[%s168 + $0x18] sm:$0xff] %v175
                %v177 = vld [vmem:[%s167 + $0x60] sm:$0xff]
                %178 = vst [vmem:[%s168 + $0x20] sm:$0xff] %v177
                %v179 = vld [vmem:[%s167 + $0x68] sm:$0xff]
                %180 = vst [vmem:[%s168 + $0x28] sm:$0xff] %v179
                %v181 = vld [vmem:[%s167 + $0x90] sm:$0xff]
                %182 = vst [vmem:[%s168 + $0x30] sm:$0xff] %v181
                %v183 = vld [vmem:[%s167 + $0x98] sm:$0xff]
                %184 = vst [vmem:[%s168 + $0x38] sm:$0xff] %v183
                %v185 = vld [vmem:[%s167 + $0xc0] sm:$0xff]
                %186 = vst [vmem:[%s168 + $0x40] sm:$0xff] %v185
                %v187 = vld [vmem:[%s167 + $0xc8] sm:$0xff]
                %188 = vst [vmem:[%s168 + $0x48] sm:$0xff] %v187
                %v189 = vld [vmem:[%s167 + $0xf0] sm:$0xff]
                %190 = vst [vmem:[%s168 + $0x50] sm:$0xff] %v189
                %v191 = vld [vmem:[%s167 + $0xf8] sm:$0xff]
                %192 = vst [vmem:[%s168 + $0x58] sm:$0xff] %v191
                %v193 = vld [vmem:[%s167 + $0x120] sm:$0xff]
                %194 = vst [vmem:[%s168 + $0x60] sm:$0xff] %v193
                %v195 = vld [vmem:[%s167 + $0x128] sm:$0xff]
                %196 = vst [vmem:[%s168 + $0x68] sm:$0xff] %v195
                %v197 = vld [vmem:[%s167 + $0x150] sm:$0xff]
                %198 = vst [vmem:[%s168 + $0x70] sm:$0xff] %v197
                %v199 = vld [vmem:[%s167 + $0x158] sm:$0xff]
                %200 = vst [vmem:[%s168 + $0x78] sm:$0xff] %v199
              $region37: #{_sign_precompute_core.3} parent=31 // loop_footer
                %s166 = sadd.s32 1, %s162
              $region38: #{_sign_precompute_core.3} parent=31 // loop_footer_branch
                %161 = sbr.rel target = $region34
              $region39: #{_sign_precompute_core.3} parent=31 // loop_exit
                _
            $region32: #{_sign_precompute_core.3} parent=27 // pred_fallthru
              _
            // Predicated region
            $region40: #{_sign_precompute_core.3} parent=27 // pred_check
              _
            $region41: #{_sign_precompute_core.3} parent=27 // pred_check_branch
              %202 = sbr.rel target = $region43
            $region42: #{_sign_precompute_core.3} parent=27 // pred_region
              _
            $region43: #{_sign_precompute_core.3} parent=27 // pred_fallthru
              _
          $region28: #{_sign_precompute_core.3} parent=23 // pred_fallthru
            _
          %203 = vnop
        $region24: #{_sign_precompute_core.3} parent=19 // pred_fallthru
          _
        // Predicated region
        $region44: #{_sign_precompute_core.3} parent=19 // pred_check
          %p204 = pneg %p69
        $region45: #{_sign_precompute_core.3} parent=19 // pred_check_branch
          %206 = sbr.rel (%p204) target = $region47
        $region46: #{_sign_precompute_core.3} parent=19 // pred_region
          %s207 = smul.u32 32, %s16
          %p208 = scmp.lt.s32.totalorder %s207, 95
          %s209 = scalar_select %p208, %s207, 95
          %s210 = smul.addr %s209, 8
          %s211 = scalar_lea.vmem %s1, %s210
          %s212 = smul.u32 32, %s16
        $region47: #{_sign_precompute_core.3} parent=19 // pred_fallthru
          _
      $region20: #{_sign_precompute_core.3} parent=5 // pred_fallthru
        _
      %p213 = scmp.le.s32.totalorder 1, %s9
      %p214 = scmp.lt.s32.totalorder %s9, 10
      %p215 = pnand %p213, %p214
      %p216 = pneg %p215
      // Predicated region
      $region48: #{_sign_precompute_core.3} parent=5 // pred_check
        _
      $region49: #{_sign_precompute_core.3} parent=5 // pred_check_branch
        %218 = sbr.rel (%p215) target = $region51
      $region50: #{_sign_precompute_core.3} parent=5 // pred_region
        %s219 = ssub.s32 %s9, 1
        %s220 = sand.u32 %s36, 1
        %s221 = sand.u32 %s36, 1
        %s222 = smul.addr %s221, 128
        %s223 = scalar_lea.vmem [#allocation2], %s222
        // Predicated region
        $region52: #{_sign_precompute_core.3} parent=50 // pred_check
          %p224 = pneg %p49
        $region53: #{_sign_precompute_core.3} parent=50 // pred_check_branch
          %226 = sbr.rel (%p224) target = $region55
        $region54: #{_sign_precompute_core.3} parent=50 // pred_region
          _
        $region55: #{_sign_precompute_core.3} parent=50 // pred_fallthru
          _
        %s227 = sand.u32 %s36, 1
        %s228 = sand.u32 %s36, 1
        %s229 = smul.addr %s228, 128
        %s230 = scalar_lea.vmem [#allocation2], %s229
        %p231 = pneg %p49
        %p232 = pneg %p46
        %s233 = smul.u32 32, %s18
        %p234 = scmp.lt.s32.totalorder %s233, 95
        %s235 = scalar_select %p234, %s233, 95
        %s236 = smul.addr %s235, 8
        %s237 = scalar_lea.vmem %s1, %s236
        %p238 = pneg %p75
        %p239 = pneg %p72
        %p240 = pneg %p96
        %p241 = pneg %p93
        %p242 = pneg %p122
        %p243 = pneg %p119
        %s244 = smul.u32 32, %s18
        %p245 = scmp.lt.s32.totalorder %s244, 95
        %s246 = scalar_select %p245, %s244, 95
        %s247 = smul.addr %s246, 8
        %s248 = scalar_lea.vmem %s3, %s247
        %s249 = smul.u32 8, %s18
        %s250 = smul.u32 2, %s19
        %s251 = smul.u32 32, %s18
        %p252 = scmp.lt.s32.totalorder %s251, 95
        %s253 = scalar_select %p252, %s251, 95
        %s254 = smul.addr %s253, 8
        %s255 = scalar_lea.vmem %s1, %s254
        %s256 = smul.u32 32, %s18
        %s257 = smul.u32 32, %s18
        %p258 = scmp.lt.s32.totalorder %s257, 95
        %s259 = scalar_select %p258, %s257, 95
        %s260 = smul.addr %s259, 8
        %s261 = scalar_lea.vmem %s3, %s260
        %s262 = smul.u32 32, %s18
        %s264 = smul.u32 %s19, 256
        %s265 = sshra.s32 %s264, 3
        %s266 = sand.u32 %s264, 7
        %s267 = smul.addr %s265, 4
        %s268 = scalar_lea.vmem %s2, %s267
        %v269 = vld [vmem:[%s268] sm:$0xf]
        %v270 = vld [vmem:[%s268 + $0x4] sm:$0xf]
        %v271 = vld [vmem:[%s268 + $0x8] sm:$0xf]
        %v272 = vld [vmem:[%s268 + $0xc] sm:$0xf]
        %v273 = vld [vmem:[%s268 + $0x10] sm:$0xf]
        %v274 = vld [vmem:[%s268 + $0x14] sm:$0xf]
        %v275 = vld [vmem:[%s268 + $0x18] sm:$0xf]
        %v276 = vld [vmem:[%s268 + $0x1c] sm:$0xf]
        %v277 = vld [vmem:[%s268 + $0x20] sm:$0xf]
        %v278 = vld [vmem:[%s268 + $0x24] sm:$0xf]
        %v279 = vld [vmem:[%s268 + $0x28] sm:$0xf]
        %v280 = vld [vmem:[%s268 + $0x2c] sm:$0xf]
        %v281 = vld [vmem:[%s268 + $0x30] sm:$0xf]
        %v282 = vld [vmem:[%s268 + $0x34] sm:$0xf]
        %v283 = vld [vmem:[%s268 + $0x38] sm:$0xf]
        %v284 = vld [vmem:[%s268 + $0x3c] sm:$0xf]
        %v285 = vld [vmem:[%s268 + $0x40] sm:$0xf]
        %v286 = vld [vmem:[%s268 + $0x44] sm:$0xf]
        %v287 = vld [vmem:[%s268 + $0x48] sm:$0xf]
        %v288 = vld [vmem:[%s268 + $0x4c] sm:$0xf]
        %v289 = vld [vmem:[%s268 + $0x50] sm:$0xf]
        %v290 = vld [vmem:[%s268 + $0x54] sm:$0xf]
        %v291 = vld [vmem:[%s268 + $0x58] sm:$0xf]
        %v292 = vld [vmem:[%s268 + $0x5c] sm:$0xf]
        %v293 = vld [vmem:[%s268 + $0x60] sm:$0xf]
        %v294 = vld [vmem:[%s268 + $0x64] sm:$0xf]
        %v295 = vld [vmem:[%s268 + $0x68] sm:$0xf]
        %v296 = vld [vmem:[%s268 + $0x6c] sm:$0xf]
        %v297 = vld [vmem:[%s268 + $0x70] sm:$0xf]
        %v298 = vld [vmem:[%s268 + $0x74] sm:$0xf]
        %v299 = vld [vmem:[%s268 + $0x78] sm:$0xf]
        %v300 = vld [vmem:[%s268 + $0x7c] sm:$0xf]
        %v301 = vld [vmem:[%s223] sm:$0xff]
        %v302 = vld [vmem:[%s223 + $0x8] sm:$0xff]
        %v303 = vld [vmem:[%s223 + $0x10] sm:$0xff]
        %v304 = vld [vmem:[%s223 + $0x18] sm:$0xff]
        %v305 = vld [vmem:[%s223 + $0x20] sm:$0xff]
        %v306 = vld [vmem:[%s223 + $0x28] sm:$0xff]
        %v307 = vld [vmem:[%s223 + $0x30] sm:$0xff]
        %v308 = vld [vmem:[%s223 + $0x38] sm:$0xff]
        %v309 = vld [vmem:[%s223 + $0x40] sm:$0xff]
        %v310 = vld [vmem:[%s223 + $0x48] sm:$0xff]
        %v311 = vld [vmem:[%s223 + $0x50] sm:$0xff]
        %v312 = vld [vmem:[%s223 + $0x58] sm:$0xff]
        %v313 = vld [vmem:[%s223 + $0x60] sm:$0xff]
        %v314 = vld [vmem:[%s223 + $0x68] sm:$0xff]
        %v315 = vld [vmem:[%s223 + $0x70] sm:$0xff]
        %v316 = vld [vmem:[%s223 + $0x78] sm:$0xff]
        %v317 = vunpack.c.l.s8.bf16 %v301
        %v318 = vunpack.c.l.s8.bf16 %v302
        %v319 = vunpack.c.h.s8.bf16 %v301
        %v320 = vunpack.c.h.s8.bf16 %v302
        %v321 = vunpack.c.l.s8.bf16 %v303
        %v322 = vunpack.c.l.s8.bf16 %v304
        %v323 = vunpack.c.h.s8.bf16 %v303
        %v324 = vunpack.c.h.s8.bf16 %v304
        %v325 = vunpack.c.l.s8.bf16 %v305
        %v326 = vunpack.c.l.s8.bf16 %v306
        %v327 = vunpack.c.h.s8.bf16 %v305
        %v328 = vunpack.c.h.s8.bf16 %v306
        %v329 = vunpack.c.l.s8.bf16 %v307
        %v330 = vunpack.c.l.s8.bf16 %v308
        %v331 = vunpack.c.h.s8.bf16 %v307
        %v332 = vunpack.c.h.s8.bf16 %v308
        %v333 = vunpack.c.l.s8.bf16 %v309
        %v334 = vunpack.c.l.s8.bf16 %v310
        %v335 = vunpack.c.h.s8.bf16 %v309
        %v336 = vunpack.c.h.s8.bf16 %v310
        %v337 = vunpack.c.l.s8.bf16 %v311
        %v338 = vunpack.c.l.s8.bf16 %v312
        %v339 = vunpack.c.h.s8.bf16 %v311
        %v340 = vunpack.c.h.s8.bf16 %v312
        %v341 = vunpack.c.l.s8.bf16 %v313
        %v342 = vunpack.c.l.s8.bf16 %v314
        %v343 = vunpack.c.h.s8.bf16 %v313
        %v344 = vunpack.c.h.s8.bf16 %v314
        %v345 = vunpack.c.l.s8.bf16 %v315
        %v346 = vunpack.c.l.s8.bf16 %v316
        %v347 = vunpack.c.h.s8.bf16 %v315
        %v348 = vunpack.c.h.s8.bf16 %v316
        %v381 = vunpack.c.l.b16 %v269
        %v382 = vunpack.c.l.b16 %v270
        %v383 = vunpack.c.l.b16 %v271
        %v384 = vunpack.c.l.b16 %v272
        %v385 = vunpack.c.l.b16 %v273
        %v386 = vunpack.c.l.b16 %v274
        %v387 = vunpack.c.l.b16 %v275
        %v388 = vunpack.c.l.b16 %v276
        %v389 = vunpack.c.l.b16 %v277
        %v390 = vunpack.c.l.b16 %v278
        %v391 = vunpack.c.l.b16 %v279
        %v392 = vunpack.c.l.b16 %v280
        %v393 = vunpack.c.l.b16 %v281
        %v394 = vunpack.c.l.b16 %v282
        %v395 = vunpack.c.l.b16 %v283
        %v396 = vunpack.c.l.b16 %v284
        %v397 = vunpack.c.l.b16 %v285
        %v398 = vunpack.c.l.b16 %v286
        %v399 = vunpack.c.l.b16 %v287
        %v400 = vunpack.c.l.b16 %v288
        %v401 = vunpack.c.l.b16 %v289
        %v402 = vunpack.c.l.b16 %v290
        %v403 = vunpack.c.l.b16 %v291
        %v404 = vunpack.c.l.b16 %v292
        %v405 = vunpack.c.l.b16 %v293
        %v406 = vunpack.c.l.b16 %v294
        %v407 = vunpack.c.l.b16 %v295
        %v408 = vunpack.c.l.b16 %v296
        %v409 = vunpack.c.l.b16 %v297
        %v410 = vunpack.c.l.b16 %v298
        %v411 = vunpack.c.l.b16 %v299
        %v412 = vunpack.c.l.b16 %v300
        %v413 = vpack.c.b16 %v382, %v381
        %v414 = vpack.c.b16 %v384, %v383
        %v415 = vpack.c.b16 %v386, %v385
        %v416 = vpack.c.b16 %v388, %v387
        %v417 = vpack.c.b16 %v390, %v389
        %v418 = vpack.c.b16 %v392, %v391
        %v419 = vpack.c.b16 %v394, %v393
        %v420 = vpack.c.b16 %v396, %v395
        %v421 = vpack.c.b16 %v398, %v397
        %v422 = vpack.c.b16 %v400, %v399
        %v423 = vpack.c.b16 %v402, %v401
        %v424 = vpack.c.b16 %v404, %v403
        %v425 = vpack.c.b16 %v406, %v405
        %v426 = vpack.c.b16 %v408, %v407
        %v427 = vpack.c.b16 %v410, %v409
        %v428 = vpack.c.b16 %v412, %v411
        %445 = vmatprep.subr.bf16.mxu0 0
        %446 = vmatpush1.bf16.msra.mxu0 %v413
        %447 = vmatprep.subr.bf16.mxu0 0
        %448 = vmatpush1.bf16.msra.mxu0 %v414
        %449 = vmatprep.subr.bf16.mxu0 0
        %450 = vmatpush1.bf16.msra.mxu0 %v415
        %451 = vmatprep.subr.bf16.mxu0 0
        %452 = vmatpush1.bf16.msra.mxu0 %v416
        %453 = vmatprep.subr.bf16.mxu0 0
        %454 = vmatpush1.bf16.msra.mxu0 %v417
        %455 = vmatprep.subr.bf16.mxu0 0
        %456 = vmatpush1.bf16.msra.mxu0 %v418
        %457 = vmatprep.subr.bf16.mxu0 0
        %458 = vmatpush1.bf16.msra.mxu0 %v419
        %459 = vmatprep.subr.bf16.mxu0 0
        %460 = vmatpush1.bf16.msra.mxu0 %v420
        %461 = vmatprep.subr.bf16.mxu0 0
        %462 = vmatpush1.bf16.msra.mxu0 %v421
        %463 = vmatprep.subr.bf16.mxu0 0
        %464 = vmatpush1.bf16.msra.mxu0 %v422
        %465 = vmatprep.subr.bf16.mxu0 0
        %466 = vmatpush1.bf16.msra.mxu0 %v423
        %467 = vmatprep.subr.bf16.mxu0 0
        %468 = vmatpush1.bf16.msra.mxu0 %v424
        %469 = vmatprep.subr.bf16.mxu0 0
        %470 = vmatpush1.bf16.msra.mxu0 %v425
        %471 = vmatprep.subr.bf16.mxu0 0
        %472 = vmatpush1.bf16.msra.mxu0 %v426
        %473 = vmatprep.subr.bf16.mxu0 0
        %474 = vmatpush1.bf16.msra.mxu0 %v427
        %475 = vmatprep.subr.bf16.mxu0 0
        %476 = vmatpush1.bf16.msra.mxu0 %v428
        %477 = vmatprep.mubr.bf16.mxu0 %v318
        %478 = vmatmul.mubr.bf16.gmra.mrb[0].mxu0 %v317
        %v479 = vpop.f32.mrb[0].mxu0
        %v480 = vadd.f32 0.0, %v479
        %v481 = vpop.f32.mrb[0].mxu0
        %v482 = vpop.f32.mrb[0].mxu0
        %v483 = vadd.f32 0.0, %v482
        %v484 = vpop.f32.mrb[0].mxu0
        %485 = vmatprep.mubr.bf16.mxu0 %v320
        %486 = vmatmul.mubr.bf16.gmra.mrb[0].mxu0 %v319
        %v487 = vpop.f32.mrb[0].mxu0
        %v488 = vadd.f32 0.0, %v487
        %v489 = vpop.f32.mrb[0].mxu0
        %v490 = vpop.f32.mrb[0].mxu0
        %v491 = vadd.f32 0.0, %v490
        %v492 = vpop.f32.mrb[0].mxu0
        %493 = vmatprep.mubr.bf16.mxu0 %v322
        %494 = vmatmul.mubr.bf16.gmra.mrb[0].mxu0 %v321
        %v495 = vpop.f32.mrb[0].mxu0
        %v496 = vadd.f32 0.0, %v495
        %v497 = vpop.f32.mrb[0].mxu0
        %v498 = vpop.f32.mrb[0].mxu0
        %v499 = vadd.f32 0.0, %v498
        %v500 = vpop.f32.mrb[0].mxu0
        %501 = vmatprep.mubr.bf16.mxu0 %v324
        %502 = vmatmul.mubr.bf16.gmra.mrb[0].mxu0 %v323
        %v503 = vpop.f32.mrb[0].mxu0
        %v504 = vadd.f32 0.0, %v503
        %v505 = vpop.f32.mrb[0].mxu0
        %v506 = vpop.f32.mrb[0].mxu0
        %v507 = vadd.f32 0.0, %v506
        %v508 = vpop.f32.mrb[0].mxu0
        %509 = vmatprep.mubr.bf16.mxu0 %v326
        %510 = vmatmul.mubr.bf16.gmra.mrb[0].mxu0 %v325
        %v511 = vpop.f32.mrb[0].mxu0
        %v512 = vadd.f32 0.0, %v511
        %v513 = vpop.f32.mrb[0].mxu0
        %v514 = vpop.f32.mrb[0].mxu0
        %v515 = vadd.f32 0.0, %v514
        %v516 = vpop.f32.mrb[0].mxu0
        %517 = vmatprep.mubr.bf16.mxu0 %v328
        %518 = vmatmul.mubr.bf16.gmra.mrb[0].mxu0 %v327
        %v519 = vpop.f32.mrb[0].mxu0
        %v520 = vadd.f32 0.0, %v519
        %v521 = vpop.f32.mrb[0].mxu0
        %v522 = vpop.f32.mrb[0].mxu0
        %v523 = vadd.f32 0.0, %v522
        %v524 = vpop.f32.mrb[0].mxu0
        %525 = vmatprep.mubr.bf16.mxu0 %v330
        %526 = vmatmul.mubr.bf16.gmra.mrb[0].mxu0 %v329
        %v527 = vpop.f32.mrb[0].mxu0
        %v528 = vadd.f32 0.0, %v527
        %v529 = vpop.f32.mrb[0].mxu0
        %v530 = vpop.f32.mrb[0].mxu0
        %v531 = vadd.f32 0.0, %v530
        %v532 = vpop.f32.mrb[0].mxu0
        %533 = vmatprep.mubr.bf16.mxu0 %v332
        %534 = vmatmul.mubr.bf16.gmra.mrb[0].mxu0 %v331
        %v535 = vpop.f32.mrb[0].mxu0
        %v536 = vadd.f32 0.0, %v535
        %v537 = vpop.f32.mrb[0].mxu0
        %v538 = vpop.f32.mrb[0].mxu0
        %v539 = vadd.f32 0.0, %v538
        %v540 = vpop.f32.mrb[0].mxu0
        %541 = vmatprep.mubr.bf16.mxu0 %v334
        %542 = vmatmul.mubr.bf16.gmra.mrb[0].mxu0 %v333
        %v543 = vpop.f32.mrb[0].mxu0
        %v544 = vadd.f32 0.0, %v543
        %v545 = vpop.f32.mrb[0].mxu0
        %v546 = vpop.f32.mrb[0].mxu0
        %v547 = vadd.f32 0.0, %v546
        %v548 = vpop.f32.mrb[0].mxu0
        %549 = vmatprep.mubr.bf16.mxu0 %v336
        %550 = vmatmul.mubr.bf16.gmra.mrb[0].mxu0 %v335
        %v551 = vpop.f32.mrb[0].mxu0
        %v552 = vadd.f32 0.0, %v551
        %v553 = vpop.f32.mrb[0].mxu0
        %v554 = vpop.f32.mrb[0].mxu0
        %v555 = vadd.f32 0.0, %v554
        %v556 = vpop.f32.mrb[0].mxu0
        %557 = vmatprep.mubr.bf16.mxu0 %v338
        %558 = vmatmul.mubr.bf16.gmra.mrb[0].mxu0 %v337
        %v559 = vpop.f32.mrb[0].mxu0
        %v560 = vadd.f32 0.0, %v559
        %v561 = vpop.f32.mrb[0].mxu0
        %v562 = vpop.f32.mrb[0].mxu0
        %v563 = vadd.f32 0.0, %v562
        %v564 = vpop.f32.mrb[0].mxu0
        %565 = vmatprep.mubr.bf16.mxu0 %v340
        %566 = vmatmul.mubr.bf16.gmra.mrb[0].mxu0 %v339
        %v567 = vpop.f32.mrb[0].mxu0
        %v568 = vadd.f32 0.0, %v567
        %v569 = vpop.f32.mrb[0].mxu0
        %v570 = vpop.f32.mrb[0].mxu0
        %v571 = vadd.f32 0.0, %v570
        %v572 = vpop.f32.mrb[0].mxu0
        %573 = vmatprep.mubr.bf16.mxu0 %v342
        %574 = vmatmul.mubr.bf16.gmra.mrb[0].mxu0 %v341
        %v575 = vpop.f32.mrb[0].mxu0
        %v576 = vadd.f32 0.0, %v575
        %v577 = vpop.f32.mrb[0].mxu0
        %v578 = vpop.f32.mrb[0].mxu0
        %v579 = vadd.f32 0.0, %v578
        %v580 = vpop.f32.mrb[0].mxu0
        %581 = vmatprep.mubr.bf16.mxu0 %v344
        %582 = vmatmul.mubr.bf16.gmra.mrb[0].mxu0 %v343
        %v583 = vpop.f32.mrb[0].mxu0
        %v584 = vadd.f32 0.0, %v583
        %v585 = vpop.f32.mrb[0].mxu0
        %v586 = vpop.f32.mrb[0].mxu0
        %v587 = vadd.f32 0.0, %v586
        %v588 = vpop.f32.mrb[0].mxu0
        %589 = vmatprep.mubr.bf16.mxu0 %v346
        %590 = vmatmul.mubr.bf16.gmra.mrb[0].mxu0 %v345
        %v591 = vpop.f32.mrb[0].mxu0
        %v592 = vadd.f32 0.0, %v591
        %v593 = vpop.f32.mrb[0].mxu0
        %v594 = vpop.f32.mrb[0].mxu0
        %v595 = vadd.f32 0.0, %v594
        %v596 = vpop.f32.mrb[0].mxu0
        %597 = vmatprep.mubr.bf16.mxu0 %v348
        %598 = vmatmul.mubr.bf16.gmra.mrb[0].mxu0 %v347
        %v599 = vpop.f32.mrb[0].mxu0
        %v600 = vadd.f32 0.0, %v599
        %v601 = vpop.f32.mrb[0].mxu0
        %v602 = vpop.f32.mrb[0].mxu0
        %v603 = vadd.f32 0.0, %v602
        %v604 = vpop.f32.mrb[0].mxu0
        %605 = vdwg.mxu0
        %p606 = scmp.eq.s32.totalorder %s19, 0
        // Predicated region
        $region56: #{_sign_precompute_core.3} parent=50 // pred_check
          %p607 = pneg %p606
        $region57: #{_sign_precompute_core.3} parent=50 // pred_check_branch
          %609 = sbr.rel (%p607) target = $region59
        $region58: #{_sign_precompute_core.3} parent=50 // pred_region
          %610 = vst [vmem:[%s261] sm:$0xff] %v480
          %611 = vst [vmem:[%s261 + $0x8] sm:$0xff] %v483
          %612 = vst [vmem:[%s261 + $0x10] sm:$0xff] %v488
          %613 = vst [vmem:[%s261 + $0x18] sm:$0xff] %v491
          %614 = vst [vmem:[%s261 + $0x20] sm:$0xff] %v496
          %615 = vst [vmem:[%s261 + $0x28] sm:$0xff] %v499
          %616 = vst [vmem:[%s261 + $0x30] sm:$0xff] %v504
          %617 = vst [vmem:[%s261 + $0x38] sm:$0xff] %v507
          %618 = vst [vmem:[%s261 + $0x40] sm:$0xff] %v512
          %619 = vst [vmem:[%s261 + $0x48] sm:$0xff] %v515
          %620 = vst [vmem:[%s261 + $0x50] sm:$0xff] %v520
          %621 = vst [vmem:[%s261 + $0x58] sm:$0xff] %v523
          %622 = vst [vmem:[%s261 + $0x60] sm:$0xff] %v528
          %623 = vst [vmem:[%s261 + $0x68] sm:$0xff] %v531
          %624 = vst [vmem:[%s261 + $0x70] sm:$0xff] %v536
          %625 = vst [vmem:[%s261 + $0x78] sm:$0xff] %v539
          %626 = vst [vmem:[%s261 + $0x80] sm:$0xff] %v544
          %627 = vst [vmem:[%s261 + $0x88] sm:$0xff] %v547
          %628 = vst [vmem:[%s261 + $0x90] sm:$0xff] %v552
          %629 = vst [vmem:[%s261 + $0x98] sm:$0xff] %v555
          %630 = vst [vmem:[%s261 + $0xa0] sm:$0xff] %v560
          %631 = vst [vmem:[%s261 + $0xa8] sm:$0xff] %v563
          %632 = vst [vmem:[%s261 + $0xb0] sm:$0xff] %v568
          %633 = vst [vmem:[%s261 + $0xb8] sm:$0xff] %v571
          %634 = vst [vmem:[%s261 + $0xc0] sm:$0xff] %v576
          %635 = vst [vmem:[%s261 + $0xc8] sm:$0xff] %v579
          %636 = vst [vmem:[%s261 + $0xd0] sm:$0xff] %v584
          %637 = vst [vmem:[%s261 + $0xd8] sm:$0xff] %v587
          %638 = vst [vmem:[%s261 + $0xe0] sm:$0xff] %v592
          %639 = vst [vmem:[%s261 + $0xe8] sm:$0xff] %v595
          %640 = vst [vmem:[%s261 + $0xf0] sm:$0xff] %v600
          %641 = vst [vmem:[%s261 + $0xf8] sm:$0xff] %v603
        $region59: #{_sign_precompute_core.3} parent=50 // pred_fallthru
          _
        %p642 = scmp.gt.s32.totalorder %s19, 0
        // Predicated region
        $region60: #{_sign_precompute_core.3} parent=50 // pred_check
          %p643 = pneg %p642
        $region61: #{_sign_precompute_core.3} parent=50 // pred_check_branch
          %645 = sbr.rel (%p643) target = $region63
        $region62: #{_sign_precompute_core.3} parent=50 // pred_region
          %v646 = vld [vmem:[%s261] sm:$0xff]
          %v647 = vld [vmem:[%s261 + $0x8] sm:$0xff]
          %v648 = vld [vmem:[%s261 + $0x10] sm:$0xff]
          %v649 = vld [vmem:[%s261 + $0x18] sm:$0xff]
          %v650 = vld [vmem:[%s261 + $0x20] sm:$0xff]
          %v651 = vld [vmem:[%s261 + $0x28] sm:$0xff]
          %v652 = vld [vmem:[%s261 + $0x30] sm:$0xff]
          %v653 = vld [vmem:[%s261 + $0x38] sm:$0xff]
          %v654 = vld [vmem:[%s261 + $0x40] sm:$0xff]
          %v655 = vld [vmem:[%s261 + $0x48] sm:$0xff]
          %v656 = vld [vmem:[%s261 + $0x50] sm:$0xff]
          %v657 = vld [vmem:[%s261 + $0x58] sm:$0xff]
          %v658 = vld [vmem:[%s261 + $0x60] sm:$0xff]
          %v659 = vld [vmem:[%s261 + $0x68] sm:$0xff]
          %v660 = vld [vmem:[%s261 + $0x70] sm:$0xff]
          %v661 = vld [vmem:[%s261 + $0x78] sm:$0xff]
          %v662 = vld [vmem:[%s261 + $0x80] sm:$0xff]
          %v663 = vld [vmem:[%s261 + $0x88] sm:$0xff]
          %v664 = vld [vmem:[%s261 + $0x90] sm:$0xff]
          %v665 = vld [vmem:[%s261 + $0x98] sm:$0xff]
          %v666 = vld [vmem:[%s261 + $0xa0] sm:$0xff]
          %v667 = vld [vmem:[%s261 + $0xa8] sm:$0xff]
          %v668 = vld [vmem:[%s261 + $0xb0] sm:$0xff]
          %v669 = vld [vmem:[%s261 + $0xb8] sm:$0xff]
          %v670 = vld [vmem:[%s261 + $0xc0] sm:$0xff]
          %v671 = vld [vmem:[%s261 + $0xc8] sm:$0xff]
          %v672 = vld [vmem:[%s261 + $0xd0] sm:$0xff]
          %v673 = vld [vmem:[%s261 + $0xd8] sm:$0xff]
          %v674 = vld [vmem:[%s261 + $0xe0] sm:$0xff]
          %v675 = vld [vmem:[%s261 + $0xe8] sm:$0xff]
          %v676 = vld [vmem:[%s261 + $0xf0] sm:$0xff]
          %v677 = vld [vmem:[%s261 + $0xf8] sm:$0xff]
          %v678 = vadd.f32 %v646, %v480
          %v679 = vadd.f32 %v647, %v483
          %v680 = vadd.f32 %v648, %v488
          %v681 = vadd.f32 %v649, %v491
          %v682 = vadd.f32 %v650, %v496
          %v683 = vadd.f32 %v651, %v499
          %v684 = vadd.f32 %v652, %v504
          %v685 = vadd.f32 %v653, %v507
          %v686 = vadd.f32 %v654, %v512
          %v687 = vadd.f32 %v655, %v515
          %v688 = vadd.f32 %v656, %v520
          %v689 = vadd.f32 %v657, %v523
          %v690 = vadd.f32 %v658, %v528
          %v691 = vadd.f32 %v659, %v531
          %v692 = vadd.f32 %v660, %v536
          %v693 = vadd.f32 %v661, %v539
          %v694 = vadd.f32 %v662, %v544
          %v695 = vadd.f32 %v663, %v547
          %v696 = vadd.f32 %v664, %v552
          %v697 = vadd.f32 %v665, %v555
          %v698 = vadd.f32 %v666, %v560
          %v699 = vadd.f32 %v667, %v563
          %v700 = vadd.f32 %v668, %v568
          %v701 = vadd.f32 %v669, %v571
          %v702 = vadd.f32 %v670, %v576
          %v703 = vadd.f32 %v671, %v579
          %v704 = vadd.f32 %v672, %v584
          %v705 = vadd.f32 %v673, %v587
          %v706 = vadd.f32 %v674, %v592
          %v707 = vadd.f32 %v675, %v595
          %v708 = vadd.f32 %v676, %v600
          %v709 = vadd.f32 %v677, %v603
          %710 = vst [vmem:[%s261] sm:$0xff] %v678
          %711 = vst [vmem:[%s261 + $0x8] sm:$0xff] %v679
          %712 = vst [vmem:[%s261 + $0x10] sm:$0xff] %v680
          %713 = vst [vmem:[%s261 + $0x18] sm:$0xff] %v681
          %714 = vst [vmem:[%s261 + $0x20] sm:$0xff] %v682
          %715 = vst [vmem:[%s261 + $0x28] sm:$0xff] %v683
          %716 = vst [vmem:[%s261 + $0x30] sm:$0xff] %v684
          %717 = vst [vmem:[%s261 + $0x38] sm:$0xff] %v685
          %718 = vst [vmem:[%s261 + $0x40] sm:$0xff] %v686
          %719 = vst [vmem:[%s261 + $0x48] sm:$0xff] %v687
          %720 = vst [vmem:[%s261 + $0x50] sm:$0xff] %v688
          %721 = vst [vmem:[%s261 + $0x58] sm:$0xff] %v689
          %722 = vst [vmem:[%s261 + $0x60] sm:$0xff] %v690
          %723 = vst [vmem:[%s261 + $0x68] sm:$0xff] %v691
          %724 = vst [vmem:[%s261 + $0x70] sm:$0xff] %v692
          %725 = vst [vmem:[%s261 + $0x78] sm:$0xff] %v693
          %726 = vst [vmem:[%s261 + $0x80] sm:$0xff] %v694
          %727 = vst [vmem:[%s261 + $0x88] sm:$0xff] %v695
          %728 = vst [vmem:[%s261 + $0x90] sm:$0xff] %v696
          %729 = vst [vmem:[%s261 + $0x98] sm:$0xff] %v697
          %730 = vst [vmem:[%s261 + $0xa0] sm:$0xff] %v698
          %731 = vst [vmem:[%s261 + $0xa8] sm:$0xff] %v699
          %732 = vst [vmem:[%s261 + $0xb0] sm:$0xff] %v700
          %733 = vst [vmem:[%s261 + $0xb8] sm:$0xff] %v701
          %734 = vst [vmem:[%s261 + $0xc0] sm:$0xff] %v702
          %735 = vst [vmem:[%s261 + $0xc8] sm:$0xff] %v703
          %736 = vst [vmem:[%s261 + $0xd0] sm:$0xff] %v704
          %737 = vst [vmem:[%s261 + $0xd8] sm:$0xff] %v705
          %738 = vst [vmem:[%s261 + $0xe0] sm:$0xff] %v706
          %739 = vst [vmem:[%s261 + $0xe8] sm:$0xff] %v707
          %740 = vst [vmem:[%s261 + $0xf0] sm:$0xff] %v708
          %741 = vst [vmem:[%s261 + $0xf8] sm:$0xff] %v709
        $region63: #{_sign_precompute_core.3} parent=50 // pred_fallthru
          _
        %p742 = scmp.eq.s32.totalorder %s19, 2
        // Predicated region
        $region64: #{_sign_precompute_core.3} parent=50 // pred_check
          %p743 = pneg %p742
        $region65: #{_sign_precompute_core.3} parent=50 // pred_check_branch
          %745 = sbr.rel (%p743) target = $region67
        $region66: #{_sign_precompute_core.3} parent=50 // pred_region
          %v746 = vld [vmem:[%s261] sm:$0xff]
          %v747 = vld [vmem:[%s261 + $0x8] sm:$0xff]
          %v748 = vld [vmem:[%s261 + $0x10] sm:$0xff]
          %v749 = vld [vmem:[%s261 + $0x18] sm:$0xff]
          %v750 = vld [vmem:[%s261 + $0x20] sm:$0xff]
          %v751 = vld [vmem:[%s261 + $0x28] sm:$0xff]
          %v752 = vld [vmem:[%s261 + $0x30] sm:$0xff]
          %v753 = vld [vmem:[%s261 + $0x38] sm:$0xff]
          %v754 = vld [vmem:[%s261 + $0x40] sm:$0xff]
          %v755 = vld [vmem:[%s261 + $0x48] sm:$0xff]
          %v756 = vld [vmem:[%s261 + $0x50] sm:$0xff]
          %v757 = vld [vmem:[%s261 + $0x58] sm:$0xff]
          %v758 = vld [vmem:[%s261 + $0x60] sm:$0xff]
          %v759 = vld [vmem:[%s261 + $0x68] sm:$0xff]
          %v760 = vld [vmem:[%s261 + $0x70] sm:$0xff]
          %v761 = vld [vmem:[%s261 + $0x78] sm:$0xff]
          %v762 = vld [vmem:[%s261 + $0x80] sm:$0xff]
          %v763 = vld [vmem:[%s261 + $0x88] sm:$0xff]
          %v764 = vld [vmem:[%s261 + $0x90] sm:$0xff]
          %v765 = vld [vmem:[%s261 + $0x98] sm:$0xff]
          %v766 = vld [vmem:[%s261 + $0xa0] sm:$0xff]
          %v767 = vld [vmem:[%s261 + $0xa8] sm:$0xff]
          %v768 = vld [vmem:[%s261 + $0xb0] sm:$0xff]
          %v769 = vld [vmem:[%s261 + $0xb8] sm:$0xff]
          %v770 = vld [vmem:[%s261 + $0xc0] sm:$0xff]
          %v771 = vld [vmem:[%s261 + $0xc8] sm:$0xff]
          %v772 = vld [vmem:[%s261 + $0xd0] sm:$0xff]
          %v773 = vld [vmem:[%s261 + $0xd8] sm:$0xff]
          %v774 = vld [vmem:[%s261 + $0xe0] sm:$0xff]
          %v775 = vld [vmem:[%s261 + $0xe8] sm:$0xff]
          %v776 = vld [vmem:[%s261 + $0xf0] sm:$0xff]
          %v777 = vld [vmem:[%s261 + $0xf8] sm:$0xff]
          %v778 = vld [vmem:[%s255] sm:$0xff]
          %v779 = vld [vmem:[%s255 + $0x8] sm:$0xff]
          %v780 = vld [vmem:[%s255 + $0x10] sm:$0xff]
          %v781 = vld [vmem:[%s255 + $0x18] sm:$0xff]
          %v782 = vld [vmem:[%s255 + $0x20] sm:$0xff]
          %v783 = vld [vmem:[%s255 + $0x28] sm:$0xff]
          %v784 = vld [vmem:[%s255 + $0x30] sm:$0xff]
          %v785 = vld [vmem:[%s255 + $0x38] sm:$0xff]
          %v786 = vld [vmem:[%s255 + $0x40] sm:$0xff]
          %v787 = vld [vmem:[%s255 + $0x48] sm:$0xff]
          %v788 = vld [vmem:[%s255 + $0x50] sm:$0xff]
          %v789 = vld [vmem:[%s255 + $0x58] sm:$0xff]
          %v790 = vld [vmem:[%s255 + $0x60] sm:$0xff]
          %v791 = vld [vmem:[%s255 + $0x68] sm:$0xff]
          %v792 = vld [vmem:[%s255 + $0x70] sm:$0xff]
          %v793 = vld [vmem:[%s255 + $0x78] sm:$0xff]
          %v794 = vld [vmem:[%s255 + $0x80] sm:$0xff]
          %v795 = vld [vmem:[%s255 + $0x88] sm:$0xff]
          %v796 = vld [vmem:[%s255 + $0x90] sm:$0xff]
          %v797 = vld [vmem:[%s255 + $0x98] sm:$0xff]
          %v798 = vld [vmem:[%s255 + $0xa0] sm:$0xff]
          %v799 = vld [vmem:[%s255 + $0xa8] sm:$0xff]
          %v800 = vld [vmem:[%s255 + $0xb0] sm:$0xff]
          %v801 = vld [vmem:[%s255 + $0xb8] sm:$0xff]
          %v802 = vld [vmem:[%s255 + $0xc0] sm:$0xff]
          %v803 = vld [vmem:[%s255 + $0xc8] sm:$0xff]
          %v804 = vld [vmem:[%s255 + $0xd0] sm:$0xff]
          %v805 = vld [vmem:[%s255 + $0xd8] sm:$0xff]
          %v806 = vld [vmem:[%s255 + $0xe0] sm:$0xff]
          %v807 = vld [vmem:[%s255 + $0xe8] sm:$0xff]
          %v808 = vld [vmem:[%s255 + $0xf0] sm:$0xff]
          %v809 = vld [vmem:[%s255 + $0xf8] sm:$0xff]
          %811 = vset.pattern.permute.xlu0 0
          %812 = vperm.xlu0 %811, %v778
          %v813 = vpop.permute.xlu0 %812
          %816 = vset.pattern.permute.xlu0 0
          %817 = vperm.xlu0 %816, %v779
          %v818 = vpop.permute.xlu0 %817
          %821 = vset.pattern.permute.xlu0 0
          %822 = vperm.xlu0 %821, %v780
          %v823 = vpop.permute.xlu0 %822
          %826 = vset.pattern.permute.xlu0 0
          %827 = vperm.xlu0 %826, %v781
          %v828 = vpop.permute.xlu0 %827
          %831 = vset.pattern.permute.xlu0 0
          %832 = vperm.xlu0 %831, %v782
          %v833 = vpop.permute.xlu0 %832
          %836 = vset.pattern.permute.xlu0 0
          %837 = vperm.xlu0 %836, %v783
          %v838 = vpop.permute.xlu0 %837
          %841 = vset.pattern.permute.xlu0 0
          %842 = vperm.xlu0 %841, %v784
          %v843 = vpop.permute.xlu0 %842
          %846 = vset.pattern.permute.xlu0 0
          %847 = vperm.xlu0 %846, %v785
          %v848 = vpop.permute.xlu0 %847
          %851 = vset.pattern.permute.xlu0 0
          %852 = vperm.xlu0 %851, %v786
          %v853 = vpop.permute.xlu0 %852
          %856 = vset.pattern.permute.xlu0 0
          %857 = vperm.xlu0 %856, %v787
          %v858 = vpop.permute.xlu0 %857
          %861 = vset.pattern.permute.xlu0 0
          %862 = vperm.xlu0 %861, %v788
          %v863 = vpop.permute.xlu0 %862
          %866 = vset.pattern.permute.xlu0 0
          %867 = vperm.xlu0 %866, %v789
          %v868 = vpop.permute.xlu0 %867
          %871 = vset.pattern.permute.xlu0 0
          %872 = vperm.xlu0 %871, %v790
          %v873 = vpop.permute.xlu0 %872
          %876 = vset.pattern.permute.xlu0 0
          %877 = vperm.xlu0 %876, %v791
          %v878 = vpop.permute.xlu0 %877
          %881 = vset.pattern.permute.xlu0 0
          %882 = vperm.xlu0 %881, %v792
          %v883 = vpop.permute.xlu0 %882
          %886 = vset.pattern.permute.xlu0 0
          %887 = vperm.xlu0 %886, %v793
          %v888 = vpop.permute.xlu0 %887
          %891 = vset.pattern.permute.xlu0 0
          %892 = vperm.xlu0 %891, %v794
          %v893 = vpop.permute.xlu0 %892
          %896 = vset.pattern.permute.xlu0 0
          %897 = vperm.xlu0 %896, %v795
          %v898 = vpop.permute.xlu0 %897
          %901 = vset.pattern.permute.xlu0 0
          %902 = vperm.xlu0 %901, %v796
          %v903 = vpop.permute.xlu0 %902
          %906 = vset.pattern.permute.xlu0 0
          %907 = vperm.xlu0 %906, %v797
          %v908 = vpop.permute.xlu0 %907
          %911 = vset.pattern.permute.xlu0 0
          %912 = vperm.xlu0 %911, %v798
          %v913 = vpop.permute.xlu0 %912
          %916 = vset.pattern.permute.xlu0 0
          %917 = vperm.xlu0 %916, %v799
          %v918 = vpop.permute.xlu0 %917
          %921 = vset.pattern.permute.xlu0 0
          %922 = vperm.xlu0 %921, %v800
          %v923 = vpop.permute.xlu0 %922
          %926 = vset.pattern.permute.xlu0 0
          %927 = vperm.xlu0 %926, %v801
          %v928 = vpop.permute.xlu0 %927
          %931 = vset.pattern.permute.xlu0 0
          %932 = vperm.xlu0 %931, %v802
          %v933 = vpop.permute.xlu0 %932
          %936 = vset.pattern.permute.xlu0 0
          %937 = vperm.xlu0 %936, %v803
          %v938 = vpop.permute.xlu0 %937
          %941 = vset.pattern.permute.xlu0 0
          %942 = vperm.xlu0 %941, %v804
          %v943 = vpop.permute.xlu0 %942
          %946 = vset.pattern.permute.xlu0 0
          %947 = vperm.xlu0 %946, %v805
          %v948 = vpop.permute.xlu0 %947
          %951 = vset.pattern.permute.xlu0 0
          %952 = vperm.xlu0 %951, %v806
          %v953 = vpop.permute.xlu0 %952
          %956 = vset.pattern.permute.xlu0 0
          %957 = vperm.xlu0 %956, %v807
          %v958 = vpop.permute.xlu0 %957
          %961 = vset.pattern.permute.xlu0 0
          %962 = vperm.xlu0 %961, %v808
          %v963 = vpop.permute.xlu0 %962
          %966 = vset.pattern.permute.xlu0 0
          %967 = vperm.xlu0 %966, %v809
          %v968 = vpop.permute.xlu0 %967
          %v970 = vmul.f32 %v746, %v813
          %v971 = vmul.f32 %v747, %v818
          %v972 = vmul.f32 %v748, %v823
          %v973 = vmul.f32 %v749, %v828
          %v974 = vmul.f32 %v750, %v833
          %v975 = vmul.f32 %v751, %v838
          %v976 = vmul.f32 %v752, %v843
          %v977 = vmul.f32 %v753, %v848
          %v978 = vmul.f32 %v754, %v853
          %v979 = vmul.f32 %v755, %v858
          %v980 = vmul.f32 %v756, %v863
          %v981 = vmul.f32 %v757, %v868
          %v982 = vmul.f32 %v758, %v873
          %v983 = vmul.f32 %v759, %v878
          %v984 = vmul.f32 %v760, %v883
          %v985 = vmul.f32 %v761, %v888
          %v986 = vmul.f32 %v762, %v893
          %v987 = vmul.f32 %v763, %v898
          %v988 = vmul.f32 %v764, %v903
          %v989 = vmul.f32 %v765, %v908
          %v990 = vmul.f32 %v766, %v913
          %v991 = vmul.f32 %v767, %v918
          %v992 = vmul.f32 %v768, %v923
          %v993 = vmul.f32 %v769, %v928
          %v994 = vmul.f32 %v770, %v933
          %v995 = vmul.f32 %v771, %v938
          %v996 = vmul.f32 %v772, %v943
          %v997 = vmul.f32 %v773, %v948
          %v998 = vmul.f32 %v774, %v953
          %v999 = vmul.f32 %v775, %v958
          %v1000 = vmul.f32 %v776, %v963
          %v1001 = vmul.f32 %v777, %v968
          %1002 = vst [vmem:[%s261] sm:$0xff] %v970
          %1003 = vst [vmem:[%s261 + $0x8] sm:$0xff] %v971
          %1004 = vst [vmem:[%s261 + $0x10] sm:$0xff] %v972
          %1005 = vst [vmem:[%s261 + $0x18] sm:$0xff] %v973
          %1006 = vst [vmem:[%s261 + $0x20] sm:$0xff] %v974
          %1007 = vst [vmem:[%s261 + $0x28] sm:$0xff] %v975
          %1008 = vst [vmem:[%s261 + $0x30] sm:$0xff] %v976
          %1009 = vst [vmem:[%s261 + $0x38] sm:$0xff] %v977
          %1010 = vst [vmem:[%s261 + $0x40] sm:$0xff] %v978
          %1011 = vst [vmem:[%s261 + $0x48] sm:$0xff] %v979
          %1012 = vst [vmem:[%s261 + $0x50] sm:$0xff] %v980
          %1013 = vst [vmem:[%s261 + $0x58] sm:$0xff] %v981
          %1014 = vst [vmem:[%s261 + $0x60] sm:$0xff] %v982
          %1015 = vst [vmem:[%s261 + $0x68] sm:$0xff] %v983
          %1016 = vst [vmem:[%s261 + $0x70] sm:$0xff] %v984
          %1017 = vst [vmem:[%s261 + $0x78] sm:$0xff] %v985
          %1018 = vst [vmem:[%s261 + $0x80] sm:$0xff] %v986
          %1019 = vst [vmem:[%s261 + $0x88] sm:$0xff] %v987
          %1020 = vst [vmem:[%s261 + $0x90] sm:$0xff] %v988
          %1021 = vst [vmem:[%s261 + $0x98] sm:$0xff] %v989
          %1022 = vst [vmem:[%s261 + $0xa0] sm:$0xff] %v990
          %1023 = vst [vmem:[%s261 + $0xa8] sm:$0xff] %v991
          %1024 = vst [vmem:[%s261 + $0xb0] sm:$0xff] %v992
          %1025 = vst [vmem:[%s261 + $0xb8] sm:$0xff] %v993
          %1026 = vst [vmem:[%s261 + $0xc0] sm:$0xff] %v994
          %1027 = vst [vmem:[%s261 + $0xc8] sm:$0xff] %v995
          %1028 = vst [vmem:[%s261 + $0xd0] sm:$0xff] %v996
          %1029 = vst [vmem:[%s261 + $0xd8] sm:$0xff] %v997
          %1030 = vst [vmem:[%s261 + $0xe0] sm:$0xff] %v998
          %1031 = vst [vmem:[%s261 + $0xe8] sm:$0xff] %v999
          %1032 = vst [vmem:[%s261 + $0xf0] sm:$0xff] %v1000
          %1033 = vst [vmem:[%s261 + $0xf8] sm:$0xff] %v1001
        $region67: #{_sign_precompute_core.3} parent=50 // pred_fallthru
          _
        %s1034 = smul.u32 32, %s18
        %p1035 = scmp.lt.s32.totalorder %s1034, 95
        %s1036 = scalar_select %p1035, %s1034, 95
        %s1037 = smul.addr %s1036, 8
        %s1038 = scalar_lea.vmem %s3, %s1037
        // Predicated region
        $region68: #{_sign_precompute_core.3} parent=50 // pred_check
          %p1039 = pneg %p119
        $region69: #{_sign_precompute_core.3} parent=50 // pred_check_branch
          %1041 = sbr.rel (%p1039) target = $region71
        $region70: #{_sign_precompute_core.3} parent=50 // pred_region
          %s1042 = smul.u32 32, %s18
        $region71: #{_sign_precompute_core.3} parent=50 // pred_fallthru
          _
      $region51: #{_sign_precompute_core.3} parent=5 // pred_fallthru
        _
      %p1043 = scmp.le.s32.totalorder 2, %s9
      // Predicated region
      $region72: #{_sign_precompute_core.3} parent=5 // pred_check
        %p1044 = pneg %p1043
      $region73: #{_sign_precompute_core.3} parent=5 // pred_check_branch
        %1046 = sbr.rel (%p1044) target = $region75
      $region74: #{_sign_precompute_core.3} parent=5 // pred_region
        %s1047 = ssub.s32 %s9, 2
        // Predicated region
        $region76: #{_sign_precompute_core.3} parent=74 // pred_check
          %p1048 = pneg %p125
        $region77: #{_sign_precompute_core.3} parent=74 // pred_check_branch
          %1050 = sbr.rel (%p1048) target = $region79
        $region78: #{_sign_precompute_core.3} parent=74 // pred_region
          %s1051 = smul.u32 32, %s20
          %p1052 = scmp.lt.s32.totalorder %s1051, 95
          %s1053 = scalar_select %p1052, %s1051, 95
          %s1054 = smul.addr %s1053, 8
          %s1055 = scalar_lea.vmem %s3, %s1054
        $region79: #{_sign_precompute_core.3} parent=74 // pred_fallthru
          _
      $region75: #{_sign_precompute_core.3} parent=5 // pred_fallthru
        _
    $region6: #{_sign_precompute_core.3} parent=1 // loop_footer
      %s13 = sadd.s32 1, %s9
    $region7: #{_sign_precompute_core.3} parent=1 // loop_footer_branch
      %8 = sbr.rel target = $region3
    $region8: #{_sign_precompute_core.3} parent=1 // loop_exit
      _

</llo_original>
